<compile_context>
chip_gen: v6e
topology: v6e:2x2x1
jax: 0.10.0
libtpu: 0.0.40
codegen_flags: <defaults>
</compile_context>

<pallas_src>
import functools
import math

import jax
import jax.numpy as jnp
from jax.experimental import pallas as pl
from jax.experimental.pallas import tpu as pltpu


def _round_up(x, m):
    return ((x + m - 1) // m) * m


def _geom(H, W, k1, p1, k2, p2):
    """All static geometry for the fused block (flat, padded-width layout)."""
    Hp1, Wq1 = H + 2 * p1, W + 2 * p1            # conv1 padded input
    H1, W1 = Hp1 - k1 + 1, Wq1 - k1 + 1          # conv1 output (valid)
    Hp2, Wq2 = H1 + 2 * p2, W1 + 2 * p2          # conv2 padded input
    H2, W2 = Hp2 - k2 + 1, Wq2 - k2 + 1          # conv2 output (valid)
    L0 = _round_up(Hp1 * Wq1 + (k1 - 1), 128)    # flat conv1 input length (lane aligned)
    L1 = H1 * Wq1                                # conv1 flat compute width
    Lm = Hp2 * Wq2 + (k2 - 1)                    # padded intermediate flat length
    L2 = H2 * Wq2                                # conv2 flat compute width
    return Hp1, Wq1, H1, W1, Hp2, Wq2, H2, W2, L0, L1, Lm, L2


def _conv_block_kernel(x_ref, w1_ref, b1_ref, w2_ref, b2_ref,
                       o_ref, col1_ref, inter_ref, col2_ref,
                       *, H, W, k1, p1, k2, p2, slope):
    # x_ref:     (1, Cin, L0)          bf16  flat zero-padded input, one batch element
    # w1_ref:    (Cmid, k1*k1*Cin)     bf16  folded eq-lr pre-scaled conv1 weights
    # b1_ref:    (Cmid, 1)             f32
    # w2_ref:    (Cout, k2*k2*Cmid)    bf16  folded conv2 weights
    # b2_ref:    (Cout, 1)             f32
    # o_ref:     (1, Cout, L2)         bf16  conv2 output in flat padded-width layout
    # col1_ref:  (k1*k1*Cin, L1)       bf16  VMEM im2col operand for conv1
    # inter_ref: (Cmid, Lm)            bf16  VMEM conv1 activation in conv2-padded layout
    # col2_ref:  (k2*k2*Cmid, L2)      bf16  VMEM im2col operand for conv2
    (Hp1, Wq1, H1, W1, Hp2, Wq2, H2, W2, L0, L1, Lm, L2) = _geom(H, W, k1, p1, k2, p2)
    Cin = x_ref.shape[1]
    Cmid = w1_ref.shape[0]
    Cout = w2_ref.shape[0]

    # ---- conv1: stage im2col operand (K = k1^2*Cin on sublanes), then ONE MXU dot ----
    # Tap slices are lane-offset loads; row offsets t*Cin are even -> pair-aligned bf16
    # sublane stores (no read-modify-write).
    for ky in range(k1):
        for kx in range(k1):
            t = ky * k1 + kx
            off = ky * Wq1 + kx                   # static flat tap offset
            col1_ref[t * Cin:(t + 1) * Cin, :] = x_ref[0, :, off:off + L1]
    acc1 = jnp.dot(w1_ref[...], col1_ref[...],
                   preferred_element_type=jnp.float32) + b1_ref[...]
    leaky1 = jnp.where(acc1 >= 0, acc1, slope * acc1)     # LeakyReLU(0.2) in f32

    # ---- stage conv1 activation into conv2's zero-padded flat layout (VMEM) ----
    shift = p2 * Wq2 + p2
    if Wq1 == Wq2:
        # Fast path (2*p2 == k1-1): one shifted, lane-dense store; the k1-1 wrap columns
        # per row are zeroed by an in-kernel mask and land exactly in conv2's padding.
        # Mask built from iota with float mul/floor only (no vector integer division).
        lane = jax.lax.broadcasted_iota(jnp.int32, (1, L1), 1).astype(jnp.float32)
        row = jnp.floor((lane + 0.5) * (1.0 / Wq1))        # exact: L1 << 2^23
        col = lane - row * Wq1                             # column within flat row
        valid = col < (W1 - 0.5)                           # False on wrap columns
        y1m = jnp.where(valid, leaky1, 0.0).astype(inter_ref.dtype)

        # Zero only the head/tail padding strips; the data range is fully overwritten
        # below and its interior padding positions receive zeros from the mask.
        if shift > 0:
            inter_ref[:, 0:shift] = jnp.zeros((Cmid, shift), inter_ref.dtype)
        tail = Lm - (shift + L1)
        if tail > 0:
            inter_ref[:, shift + L1:Lm] = jnp.zeros((Cmid, tail), inter_ref.dtype)
        inter_ref[:, shift:shift + L1] = y1m
    else:
        # General fallback (e.g. k2=4, p2=0 final block): per-row staging.  Slow path:
        # sub-128-lane masked stores; acceptable only at tiny resolutions.
        inter_ref[...] = jnp.zeros(inter_ref.shape, inter_ref.dtype)
        y1b = leaky1.astype(inter_ref.dtype)
        for h in range(H1):
            dst = (h + p2) * Wq2 + p2
            inter_ref[:, dst:dst + W1] = y1b[:, h * Wq1:h * Wq1 + W1]

    # ---- conv2: im2col from the padded intermediate, then ONE MXU dot ----
    for ky in range(k2):
        for kx in range(k2):
            t = ky * k2 + kx
            off = ky * Wq2 + kx
            col2_ref[t * Cmid:(t + 1) * Cmid, :] = inter_ref[:, off:off + L2]
    acc2 = jnp.dot(w2_ref[...], col2_ref[...],
                   preferred_element_type=jnp.float32) + b2_ref[...]
    y2 = jnp.where(acc2 >= 0, acc2, slope * acc2)
    o_ref[0] = y2.astype(o_ref.dtype)


def conv_block_forward(x_nchw, w1f, b1, w2f, b2, *, k1, p1, k2, p2, slope=0.2):
    """Fused ScaledConv2d+LReLU -> ScaledConv2d+LReLU.

    x: (N, Cin, H, W); weights pre-folded to (Cout, k*k*Cin) bf16.  Returns bf16 NCHW.
    """
    N, Cin, H, W = x_nchw.shape
    Cmid, K1 = w1f.shape
    Cout, K2 = w2f.shape
    (Hp1, Wq1, H1, W1, Hp2, Wq2, H2, W2, L0, L1, Lm, L2) = _geom(H, W, k1, p1, k2, p2)

    # bf16, spatially zero-padded, flattened input: (N, Cin, L0), spatial on lanes.
    xb = x_nchw.astype(jnp.bfloat16)
    xp = jnp.pad(xb, ((0, 0), (0, 0), (p1, p1), (p1, p1)))
    xf = jnp.pad(xp.reshape(N, Cin, Hp1 * Wq1),
                 ((0, 0), (0, 0), (0, L0 - Hp1 * Wq1)))

    kernel = functools.partial(_conv_block_kernel, H=H, W=W, k1=k1, p1=p1,
                               k2=k2, p2=p2, slope=slope)

    out_flat = pl.pallas_call(
        kernel,
        out_shape=jax.ShapeDtypeStruct((N, Cout, L2), jnp.bfloat16),
        grid=(N,),
        in_specs=[
            pl.BlockSpec((1, Cin, L0), lambda n: (n, 0, 0)),
            pl.BlockSpec((Cmid, K1), lambda n: (0, 0)),
            pl.BlockSpec((Cmid, 1), lambda n: (0, 0)),
            pl.BlockSpec((Cout, K2), lambda n: (0, 0)),
            pl.BlockSpec((Cout, 1), lambda n: (0, 0)),
        ],
        out_specs=pl.BlockSpec((1, Cout, L2), lambda n: (n, 0, 0)),
        scratch_shapes=[
            pltpu.VMEM((K1, L1), jnp.bfloat16),   # conv1 im2col operand
            pltpu.VMEM((Cmid, Lm), jnp.bfloat16), # padded intermediate activation
            pltpu.VMEM((K2, L2), jnp.bfloat16),   # conv2 im2col operand
        ],
        compiler_params=pltpu.CompilerParams(
            dimension_semantics=("parallel",),
            vmem_limit_bytes=32 * 1024 * 1024),
    )(xf, w1f, b1, w2f, b2)

    # (N, Cout, H2*Wq2) bf16 -> drop the k2-1 wrap columns -> NCHW (stays bf16 so the
    # slice pass moves half the bytes of an f32 output; keep the padded flat layout
    # flowing into the next fused stage when chaining blocks).
    return out_flat.reshape(N, Cout, H2, Wq2)[:, :, :, :W2]


class ConvBlockPallas:
    """Pallas port of ConvBlock(in_ch, out_ch, k1, p1, k2, p2)."""

    def __init__(self, key, in_channels, out_channels,
                 kernel1_size, padding1, kernel2_size=None, padding2=None):
        if kernel2_size is None:
            kernel2_size = kernel1_size
        if padding2 is None:
            padding2 = padding1
        self.k1, self.p1 = kernel1_size, padding1
        self.k2, self.p2 = kernel2_size, padding2

        k1key, k2key = jax.random.split(key)
        # PyTorch ScaledConv2d init: weight ~ N(0,1), bias = 0.
        w1 = jax.random.normal(
            k1key, (out_channels, in_channels, kernel1_size, kernel1_size), jnp.float32)
        w2 = jax.random.normal(
            k2key, (out_channels, out_channels, kernel2_size, kernel2_size), jnp.float32)

        # Equalized-lr scale applied at forward time: sqrt(2 / fan_in).
        s1 = math.sqrt(2.0 / (in_channels * kernel1_size * kernel1_size))
        s2 = math.sqrt(2.0 / (out_channels * kernel2_size * kernel2_size))

        # Fold (Cout, Cin, k, k) -> (Cout, k*k*Cin): column order (ky*k+kx)*Cin + cin
        # matches the im2col row order built inside the kernel.  bf16 for the MXU.
        self.w1 = (jnp.transpose(w1, (0, 2, 3, 1))
                   .reshape(out_channels, kernel1_size * kernel1_size * in_channels)
                   * s1).astype(jnp.bfloat16)
        self.w2 = (jnp.transpose(w2, (0, 2, 3, 1))
                   .reshape(out_channels, kernel2_size * kernel2_size * out_channels)
                   * s2).astype(jnp.bfloat16)
        # Bias kept in f32 (added to the f32 dot result inside the kernel).
        self.b1 = jnp.zeros((out_channels, 1), jnp.float32)
        self.b2 = jnp.zeros((out_channels, 1), jnp.float32)

    def __call__(self, x_nchw):
        return conv_block_forward(x_nchw, self.w1, self.b1, self.w2, self.b2,
                                  k1=self.k1, p1=self.p1, k2=self.k2, p2=self.p2)


def _folded_to_oihw(wf, k, cin):
    # (Cout, k*k*Cin) -> (Cout, Cin, k, k)   (for the reference check only)
    cout = wf.shape[0]
    return jnp.transpose(wf.reshape(cout, k, k, cin), (0, 3, 1, 2))


if __name__ == "__main__":
    key = jax.random.PRNGKey(0)
    kp, kx = jax.random.split(key)

    batch, in_ch, out_ch, hw = 2, 4, 8, 16
    block = ConvBlockPallas(kp, in_ch, out_ch, kernel1_size=3, padding1=1)

    x = jax.random.normal(kx, (batch, in_ch, hw, hw), dtype=jnp.float32)
    y = jax.block_until_ready(block(x))
    assert y.shape == (batch, out_ch, hw, hw), y.shape

    # Reference with matching numerics: bf16 matmul operands, f32 accumulation,
    # bf16 intermediate activation (second layer casts its input to bf16).
    def ref_layer(inp, w_oihw, b, pad):
        out = jax.lax.conv_general_dilated(
            inp.astype(jnp.bfloat16), w_oihw, window_strides=(1, 1),
            padding=((pad, pad), (pad, pad)),
            dimension_numbers=("NCHW", "OIHW", "NCHW"),
            preferred_element_type=jnp.float32)
        out = out + b.reshape(1, -1, 1, 1)
        return jnp.where(out >= 0, out, 0.2 * out)

    w1_oihw = _folded_to_oihw(block.w1, block.k1, in_ch)
    w2_oihw = _folded_to_oihw(block.w2, block.k2, out_ch)
    y_ref = ref_layer(ref_layer(x, w1_oihw, block.b1, block.p1),
                      w2_oihw, block.b2, block.p2)

    yf = y.astype(jnp.float32)
    max_err = float(jnp.max(jnp.abs(yf - y_ref)))
    assert jnp.allclose(yf, y_ref, atol=3e-2, rtol=3e-2), max_err

    print("KERNEL_OK")
</pallas_src>

<mosaic_0001>
module attributes {stable_mosaic.version = 11 : i64} {
  func.func @_conv_block_kernel(%arg0: i32, %arg1: memref<1x4x384xbf16, #tpu.memory_space<vmem>>, %arg2: memref<8x36xbf16, #tpu.memory_space<vmem>>, %arg3: memref<8x1xf32, #tpu.memory_space<vmem>>, %arg4: memref<8x72xbf16, #tpu.memory_space<vmem>>, %arg5: memref<8x1xf32, #tpu.memory_space<vmem>>, %arg6: memref<1x8x288xbf16, #tpu.memory_space<vmem>>, %arg7: memref<36x288xbf16, #tpu.memory_space<vmem>>, %arg8: memref<8x326xbf16, #tpu.memory_space<vmem>>, %arg9: memref<72x288xbf16, #tpu.memory_space<vmem>>) attributes {dimension_semantics = [#tpu.dimension_semantics<parallel>], iteration_bounds = array<i64: 2>, scalar_prefetch = 0 : i64, scratch_operands = 3 : i64, tpu.core_type = #tpu.core_type<tc>, window_params = [{transform_indices = @transform_0, window_bounds = array<i64: 1, 4, 384>}, {pipeline_mode = #tpu.pipeline_mode<synchronous>, transform_indices = @transform_1, window_bounds = array<i64: 8, 36>}, {pipeline_mode = #tpu.pipeline_mode<synchronous>, transform_indices = @transform_2, window_bounds = array<i64: 8, 1>}, {pipeline_mode = #tpu.pipeline_mode<synchronous>, transform_indices = @transform_3, window_bounds = array<i64: 8, 72>}, {pipeline_mode = #tpu.pipeline_mode<synchronous>, transform_indices = @transform_4, window_bounds = array<i64: 8, 1>}, {transform_indices = @transform_5, window_bounds = array<i64: 1, 8, 288>}]} {
    %c0 = arith.constant 0 : index
    %c0_0 = arith.constant 0 : index
    %c0_1 = arith.constant 0 : index
    %0 = vector.load %arg1[%c0, %c0_0, %c0_1] : memref<1x4x384xbf16, #tpu.memory_space<vmem>>, vector<1x4x288xbf16>
    %1 = vector.shape_cast %0 : vector<1x4x288xbf16> to vector<4x288xbf16>
    %c0_2 = arith.constant 0 : index
    %c0_3 = arith.constant 0 : index
    %2 = vector.load %arg7[%c0_2, %c0_3] : memref<36x288xbf16, #tpu.memory_space<vmem>>, vector<4x288xbf16>
    tpu.vector_store %arg7[%c0_2, %c0_3], %1 {strides = array<i32>} : memref<36x288xbf16, #tpu.memory_space<vmem>>, vector<4x288xbf16>,
    %c0_4 = arith.constant 0 : index
    %c0_5 = arith.constant 0 : index
    %c1 = arith.constant 1 : index
    %3 = vector.load %arg1[%c0_4, %c0_5, %c1] : memref<1x4x384xbf16, #tpu.memory_space<vmem>>, vector<1x4x288xbf16>
    %4 = vector.shape_cast %3 : vector<1x4x288xbf16> to vector<4x288xbf16>
    %c4 = arith.constant 4 : index
    %c0_6 = arith.constant 0 : index
    %5 = vector.load %arg7[%c4, %c0_6] : memref<36x288xbf16, #tpu.memory_space<vmem>>, vector<4x288xbf16>
    tpu.vector_store %arg7[%c4, %c0_6], %4 {strides = array<i32>} : memref<36x288xbf16, #tpu.memory_space<vmem>>, vector<4x288xbf16>,
    %c0_7 = arith.constant 0 : index
    %c0_8 = arith.constant 0 : index
    %c2 = arith.constant 2 : index
    %6 = vector.load %arg1[%c0_7, %c0_8, %c2] : memref<1x4x384xbf16, #tpu.memory_space<vmem>>, vector<1x4x288xbf16>
    %7 = vector.shape_cast %6 : vector<1x4x288xbf16> to vector<4x288xbf16>
    %c8 = arith.constant 8 : index
    %c0_9 = arith.constant 0 : index
    %8 = vector.load %arg7[%c8, %c0_9] : memref<36x288xbf16, #tpu.memory_space<vmem>>, vector<4x288xbf16>
    tpu.vector_store %arg7[%c8, %c0_9], %7 {strides = array<i32>} : memref<36x288xbf16, #tpu.memory_space<vmem>>, vector<4x288xbf16>,
    %c0_10 = arith.constant 0 : index
    %c0_11 = arith.constant 0 : index
    %c18 = arith.constant 18 : index
    %9 = vector.load %arg1[%c0_10, %c0_11, %c18] : memref<1x4x384xbf16, #tpu.memory_space<vmem>>, vector<1x4x288xbf16>
    %10 = vector.shape_cast %9 : vector<1x4x288xbf16> to vector<4x288xbf16>
    %c12 = arith.constant 12 : index
    %c0_12 = arith.constant 0 : index
    %11 = vector.load %arg7[%c12, %c0_12] : memref<36x288xbf16, #tpu.memory_space<vmem>>, vector<4x288xbf16>
    tpu.vector_store %arg7[%c12, %c0_12], %10 {strides = array<i32>} : memref<36x288xbf16, #tpu.memory_space<vmem>>, vector<4x288xbf16>,
    %c0_13 = arith.constant 0 : index
    %c0_14 = arith.constant 0 : index
    %c19 = arith.constant 19 : index
    %12 = vector.load %arg1[%c0_13, %c0_14, %c19] : memref<1x4x384xbf16, #tpu.memory_space<vmem>>, vector<1x4x288xbf16>
    %13 = vector.shape_cast %12 : vector<1x4x288xbf16> to vector<4x288xbf16>
    %c16 = arith.constant 16 : index
    %c0_15 = arith.constant 0 : index
    %14 = vector.load %arg7[%c16, %c0_15] : memref<36x288xbf16, #tpu.memory_space<vmem>>, vector<4x288xbf16>
    tpu.vector_store %arg7[%c16, %c0_15], %13 {strides = array<i32>} : memref<36x288xbf16, #tpu.memory_space<vmem>>, vector<4x288xbf16>,
    %c0_16 = arith.constant 0 : index
    %c0_17 = arith.constant 0 : index
    %c20 = arith.constant 20 : index
    %15 = vector.load %arg1[%c0_16, %c0_17, %c20] : memref<1x4x384xbf16, #tpu.memory_space<vmem>>, vector<1x4x288xbf16>
    %16 = vector.shape_cast %15 : vector<1x4x288xbf16> to vector<4x288xbf16>
    %c20_18 = arith.constant 20 : index
    %c0_19 = arith.constant 0 : index
    %17 = vector.load %arg7[%c20_18, %c0_19] : memref<36x288xbf16, #tpu.memory_space<vmem>>, vector<4x288xbf16>
    tpu.vector_store %arg7[%c20_18, %c0_19], %16 {strides = array<i32>} : memref<36x288xbf16, #tpu.memory_space<vmem>>, vector<4x288xbf16>,
    %c0_20 = arith.constant 0 : index
    %c0_21 = arith.constant 0 : index
    %c36 = arith.constant 36 : index
    %18 = vector.load %arg1[%c0_20, %c0_21, %c36] : memref<1x4x384xbf16, #tpu.memory_space<vmem>>, vector<1x4x288xbf16>
    %19 = vector.shape_cast %18 : vector<1x4x288xbf16> to vector<4x288xbf16>
    %c24 = arith.constant 24 : index
    %c0_22 = arith.constant 0 : index
    %20 = vector.load %arg7[%c24, %c0_22] : memref<36x288xbf16, #tpu.memory_space<vmem>>, vector<4x288xbf16>
    tpu.vector_store %arg7[%c24, %c0_22], %19 {strides = array<i32>} : memref<36x288xbf16, #tpu.memory_space<vmem>>, vector<4x288xbf16>,
    %c0_23 = arith.constant 0 : index
    %c0_24 = arith.constant 0 : index
    %c37 = arith.constant 37 : index
    %21 = vector.load %arg1[%c0_23, %c0_24, %c37] : memref<1x4x384xbf16, #tpu.memory_space<vmem>>, vector<1x4x288xbf16>
    %22 = vector.shape_cast %21 : vector<1x4x288xbf16> to vector<4x288xbf16>
    %c28 = arith.constant 28 : index
    %c0_25 = arith.constant 0 : index
    %23 = vector.load %arg7[%c28, %c0_25] : memref<36x288xbf16, #tpu.memory_space<vmem>>, vector<4x288xbf16>
    tpu.vector_store %arg7[%c28, %c0_25], %22 {strides = array<i32>} : memref<36x288xbf16, #tpu.memory_space<vmem>>, vector<4x288xbf16>,
    %c0_26 = arith.constant 0 : index
    %c0_27 = arith.constant 0 : index
    %c38 = arith.constant 38 : index
    %24 = vector.load %arg1[%c0_26, %c0_27, %c38] : memref<1x4x384xbf16, #tpu.memory_space<vmem>>, vector<1x4x288xbf16>
    %25 = vector.shape_cast %24 : vector<1x4x288xbf16> to vector<4x288xbf16>
    %c32 = arith.constant 32 : index
    %c0_28 = arith.constant 0 : index
    %26 = vector.load %arg7[%c32, %c0_28] : memref<36x288xbf16, #tpu.memory_space<vmem>>, vector<4x288xbf16>
    tpu.vector_store %arg7[%c32, %c0_28], %25 {strides = array<i32>} : memref<36x288xbf16, #tpu.memory_space<vmem>>, vector<4x288xbf16>,
    %c0_29 = arith.constant 0 : index
    %c0_30 = arith.constant 0 : index
    %27 = vector.load %arg2[%c0_29, %c0_30] : memref<8x36xbf16, #tpu.memory_space<vmem>>, vector<8x36xbf16>
    %c0_31 = arith.constant 0 : index
    %c0_32 = arith.constant 0 : index
    %28 = vector.load %arg7[%c0_31, %c0_32] : memref<36x288xbf16, #tpu.memory_space<vmem>>, vector<36x288xbf16>
    %cst = arith.constant dense<0.000000e+00> : vector<8x288xf32>
    %29 = tpu.matmul %27, %28, %cst {dimension_numbers = #tpu.dot_dimension_numbers<[1], [0], [0], [1], [0, 0, 1, 1], [], []>} : vector<8x36xbf16>, vector<36x288xbf16>, vector<8x288xf32> -> vector<8x288xf32>
    %c0_33 = arith.constant 0 : index
    %c0_34 = arith.constant 0 : index
    %30 = vector.load %arg3[%c0_33, %c0_34] : memref<8x1xf32, #tpu.memory_space<vmem>>, vector<8x1xf32>
    %31 = vector.broadcast %30 : vector<8x1xf32> to vector<8x288xf32>
    %32 = arith.addf %29, %31 : vector<8x288xf32>
    %cst_35 = arith.constant 0.000000e+00 : f32
    %33 = vector.broadcast %cst_35 : f32 to vector<8x288xf32>
    %34 = arith.cmpf oge, %32, %33 : vector<8x288xf32>
    %cst_36 = arith.constant 2.000000e-01 : f32
    %35 = vector.broadcast %cst_36 : f32 to vector<8x288xf32>
    %36 = arith.mulf %35, %32 : vector<8x288xf32>
    %37 = arith.select %34, %32, %36 : vector<8x288xi1>, vector<8x288xf32>
    %38 = tpu.iota {dimensions = array<i32: 1>} : vector<1x288xi32>
    %39 = arith.sitofp %38 : vector<1x288xi32> to vector<1x288xf32>
    %cst_37 = arith.constant 5.000000e-01 : f32
    %40 = vector.broadcast %cst_37 : f32 to vector<1x288xf32>
    %41 = arith.addf %39, %40 : vector<1x288xf32>
    %cst_38 = arith.constant 0.055555556 : f32
    %42 = vector.broadcast %cst_38 : f32 to vector<1x288xf32>
    %43 = arith.mulf %41, %42 : vector<1x288xf32>
    %44 = math.floor %43 : vector<1x288xf32>
    %cst_39 = arith.constant 1.800000e+01 : f32
    %45 = vector.broadcast %cst_39 : f32 to vector<1x288xf32>
    %46 = arith.mulf %44, %45 : vector<1x288xf32>
    %47 = arith.subf %39, %46 : vector<1x288xf32>
    %cst_40 = arith.constant 1.550000e+01 : f32
    %48 = vector.broadcast %cst_40 : f32 to vector<1x288xf32>
    %49 = arith.cmpf olt, %47, %48 : vector<1x288xf32>
    %cst_41 = arith.constant 0.000000e+00 : f32
    %50 = vector.shape_cast %49 : vector<1x288xi1> to vector<1x288xi1>
    %51 = vector.broadcast %50 : vector<1x288xi1> to vector<8x288xi1>
    %52 = vector.broadcast %cst_41 : f32 to vector<8x288xf32>
    %53 = arith.select %51, %37, %52 : vector<8x288xi1>, vector<8x288xf32>
    %54 = arith.truncf %53 : vector<8x288xf32> to vector<8x288xbf16>
    %cst_42 = arith.constant 0.000000e+00 : bf16
    %55 = vector.broadcast %cst_42 : bf16 to vector<8x19xbf16>
    %c0_43 = arith.constant 0 : index
    %c0_44 = arith.constant 0 : index
    %56 = vector.load %arg8[%c0_43, %c0_44] : memref<8x326xbf16, #tpu.memory_space<vmem>>, vector<8x19xbf16>
    tpu.vector_store %arg8[%c0_43, %c0_44], %55 {strides = array<i32>} : memref<8x326xbf16, #tpu.memory_space<vmem>>, vector<8x19xbf16>,
    %cst_45 = arith.constant 0.000000e+00 : bf16
    %57 = vector.broadcast %cst_45 : bf16 to vector<8x19xbf16>
    %c0_46 = arith.constant 0 : index
    %c307 = arith.constant 307 : index
    %58 = vector.load %arg8[%c0_46, %c307] : memref<8x326xbf16, #tpu.memory_space<vmem>>, vector<8x19xbf16>
    tpu.vector_store %arg8[%c0_46, %c307], %57 {strides = array<i32>} : memref<8x326xbf16, #tpu.memory_space<vmem>>, vector<8x19xbf16>,
    %c0_47 = arith.constant 0 : index
    %c19_48 = arith.constant 19 : index
    %59 = vector.load %arg8[%c0_47, %c19_48] : memref<8x326xbf16, #tpu.memory_space<vmem>>, vector<8x288xbf16>
    tpu.vector_store %arg8[%c0_47, %c19_48], %54 {strides = array<i32>} : memref<8x326xbf16, #tpu.memory_space<vmem>>, vector<8x288xbf16>,
    %c0_49 = arith.constant 0 : index
    %c0_50 = arith.constant 0 : index
    %60 = vector.load %arg8[%c0_49, %c0_50] : memref<8x326xbf16, #tpu.memory_space<vmem>>, vector<8x288xbf16>
    %c0_51 = arith.constant 0 : index
    %c0_52 = arith.constant 0 : index
    %61 = vector.load %arg9[%c0_51, %c0_52] : memref<72x288xbf16, #tpu.memory_space<vmem>>, vector<8x288xbf16>
    tpu.vector_store %arg9[%c0_51, %c0_52], %60 {strides = array<i32>} : memref<72x288xbf16, #tpu.memory_space<vmem>>, vector<8x288xbf16>,
    %c0_53 = arith.constant 0 : index
    %c1_54 = arith.constant 1 : index
    %62 = vector.load %arg8[%c0_53, %c1_54] : memref<8x326xbf16, #tpu.memory_space<vmem>>, vector<8x288xbf16>
    %c8_55 = arith.constant 8 : index
    %c0_56 = arith.constant 0 : index
    %63 = vector.load %arg9[%c8_55, %c0_56] : memref<72x288xbf16, #tpu.memory_space<vmem>>, vector<8x288xbf16>
    tpu.vector_store %arg9[%c8_55, %c0_56], %62 {strides = array<i32>} : memref<72x288xbf16, #tpu.memory_space<vmem>>, vector<8x288xbf16>,
    %c0_57 = arith.constant 0 : index
    %c2_58 = arith.constant 2 : index
    %64 = vector.load %arg8[%c0_57, %c2_58] : memref<8x326xbf16, #tpu.memory_space<vmem>>, vector<8x288xbf16>
    %c16_59 = arith.constant 16 : index
    %c0_60 = arith.constant 0 : index
    %65 = vector.load %arg9[%c16_59, %c0_60] : memref<72x288xbf16, #tpu.memory_space<vmem>>, vector<8x288xbf16>
    tpu.vector_store %arg9[%c16_59, %c0_60], %64 {strides = array<i32>} : memref<72x288xbf16, #tpu.memory_space<vmem>>, vector<8x288xbf16>,
    %c0_61 = arith.constant 0 : index
    %c18_62 = arith.constant 18 : index
    %66 = vector.load %arg8[%c0_61, %c18_62] : memref<8x326xbf16, #tpu.memory_space<vmem>>, vector<8x288xbf16>
    %c24_63 = arith.constant 24 : index
    %c0_64 = arith.constant 0 : index
    %67 = vector.load %arg9[%c24_63, %c0_64] : memref<72x288xbf16, #tpu.memory_space<vmem>>, vector<8x288xbf16>
    tpu.vector_store %arg9[%c24_63, %c0_64], %66 {strides = array<i32>} : memref<72x288xbf16, #tpu.memory_space<vmem>>, vector<8x288xbf16>,
    %c0_65 = arith.constant 0 : index
    %c19_66 = arith.constant 19 : index
    %68 = vector.load %arg8[%c0_65, %c19_66] : memref<8x326xbf16, #tpu.memory_space<vmem>>, vector<8x288xbf16>
    %c32_67 = arith.constant 32 : index
    %c0_68 = arith.constant 0 : index
    %69 = vector.load %arg9[%c32_67, %c0_68] : memref<72x288xbf16, #tpu.memory_space<vmem>>, vector<8x288xbf16>
    tpu.vector_store %arg9[%c32_67, %c0_68], %68 {strides = array<i32>} : memref<72x288xbf16, #tpu.memory_space<vmem>>, vector<8x288xbf16>,
    %c0_69 = arith.constant 0 : index
    %c20_70 = arith.constant 20 : index
    %70 = vector.load %arg8[%c0_69, %c20_70] : memref<8x326xbf16, #tpu.memory_space<vmem>>, vector<8x288xbf16>
    %c40 = arith.constant 40 : index
    %c0_71 = arith.constant 0 : index
    %71 = vector.load %arg9[%c40, %c0_71] : memref<72x288xbf16, #tpu.memory_space<vmem>>, vector<8x288xbf16>
    tpu.vector_store %arg9[%c40, %c0_71], %70 {strides = array<i32>} : memref<72x288xbf16, #tpu.memory_space<vmem>>, vector<8x288xbf16>,
    %c0_72 = arith.constant 0 : index
    %c36_73 = arith.constant 36 : index
    %72 = vector.load %arg8[%c0_72, %c36_73] : memref<8x326xbf16, #tpu.memory_space<vmem>>, vector<8x288xbf16>
    %c48 = arith.constant 48 : index
    %c0_74 = arith.constant 0 : index
    %73 = vector.load %arg9[%c48, %c0_74] : memref<72x288xbf16, #tpu.memory_space<vmem>>, vector<8x288xbf16>
    tpu.vector_store %arg9[%c48, %c0_74], %72 {strides = array<i32>} : memref<72x288xbf16, #tpu.memory_space<vmem>>, vector<8x288xbf16>,
    %c0_75 = arith.constant 0 : index
    %c37_76 = arith.constant 37 : index
    %74 = vector.load %arg8[%c0_75, %c37_76] : memref<8x326xbf16, #tpu.memory_space<vmem>>, vector<8x288xbf16>
    %c56 = arith.constant 56 : index
    %c0_77 = arith.constant 0 : index
    %75 = vector.load %arg9[%c56, %c0_77] : memref<72x288xbf16, #tpu.memory_space<vmem>>, vector<8x288xbf16>
    tpu.vector_store %arg9[%c56, %c0_77], %74 {strides = array<i32>} : memref<72x288xbf16, #tpu.memory_space<vmem>>, vector<8x288xbf16>,
    %c0_78 = arith.constant 0 : index
    %c38_79 = arith.constant 38 : index
    %76 = vector.load %arg8[%c0_78, %c38_79] : memref<8x326xbf16, #tpu.memory_space<vmem>>, vector<8x288xbf16>
    %c64 = arith.constant 64 : index
    %c0_80 = arith.constant 0 : index
    %77 = vector.load %arg9[%c64, %c0_80] : memref<72x288xbf16, #tpu.memory_space<vmem>>, vector<8x288xbf16>
    tpu.vector_store %arg9[%c64, %c0_80], %76 {strides = array<i32>} : memref<72x288xbf16, #tpu.memory_space<vmem>>, vector<8x288xbf16>,
    %c0_81 = arith.constant 0 : index
    %c0_82 = arith.constant 0 : index
    %78 = vector.load %arg4[%c0_81, %c0_82] : memref<8x72xbf16, #tpu.memory_space<vmem>>, vector<8x72xbf16>
    %c0_83 = arith.constant 0 : index
    %c0_84 = arith.constant 0 : index
    %79 = vector.load %arg9[%c0_83, %c0_84] : memref<72x288xbf16, #tpu.memory_space<vmem>>, vector<72x288xbf16>
    %cst_85 = arith.constant dense<0.000000e+00> : vector<8x288xf32>
    %80 = tpu.matmul %78, %79, %cst_85 {dimension_numbers = #tpu.dot_dimension_numbers<[1], [0], [0], [1], [0, 0, 1, 1], [], []>} : vector<8x72xbf16>, vector<72x288xbf16>, vector<8x288xf32> -> vector<8x288xf32>
    %c0_86 = arith.constant 0 : index
    %c0_87 = arith.constant 0 : index
    %81 = vector.load %arg5[%c0_86, %c0_87] : memref<8x1xf32, #tpu.memory_space<vmem>>, vector<8x1xf32>
    %82 = vector.broadcast %81 : vector<8x1xf32> to vector<8x288xf32>
    %83 = arith.addf %80, %82 : vector<8x288xf32>
    %cst_88 = arith.constant 0.000000e+00 : f32
    %84 = vector.broadcast %cst_88 : f32 to vector<8x288xf32>
    %85 = arith.cmpf oge, %83, %84 : vector<8x288xf32>
    %cst_89 = arith.constant 2.000000e-01 : f32
    %86 = vector.broadcast %cst_89 : f32 to vector<8x288xf32>
    %87 = arith.mulf %86, %83 : vector<8x288xf32>
    %88 = arith.select %85, %83, %87 : vector<8x288xi1>, vector<8x288xf32>
    %89 = arith.truncf %88 : vector<8x288xf32> to vector<8x288xbf16>
    %c0_90 = arith.constant 0 : index
    %c0_91 = arith.constant 0 : index
    %c0_92 = arith.constant 0 : index
    %90 = vector.load %arg6[%c0_90, %c0_91, %c0_92] : memref<1x8x288xbf16, #tpu.memory_space<vmem>>, vector<1x8x288xbf16>
    %91 = vector.shape_cast %90 : vector<1x8x288xbf16> to vector<8x288xbf16>
    %92 = vector.shape_cast %89 : vector<8x288xbf16> to vector<1x8x288xbf16>
    tpu.vector_store %arg6[%c0_90, %c0_91, %c0_92], %92 {strides = array<i32>} : memref<1x8x288xbf16, #tpu.memory_space<vmem>>, vector<1x8x288xbf16>,
    return
  }
  func.func @transform_0(%arg0: i32) -> (i32, i32, i32) {
    %c0_i32 = arith.constant 0 : i32
    %c0_i32_0 = arith.constant 0 : i32
    %c0_i32_1 = arith.constant 0 : i32
    return %arg0, %c0_i32, %c0_i32_0 : i32, i32, i32
  }
  func.func @transform_1(%arg0: i32) -> (i32, i32) {
    %c0_i32 = arith.constant 0 : i32
    %c0_i32_0 = arith.constant 0 : i32
    %c0_i32_1 = arith.constant 0 : i32
    return %c0_i32, %c0_i32_0 : i32, i32
  }
  func.func @transform_2(%arg0: i32) -> (i32, i32) {
    %c0_i32 = arith.constant 0 : i32
    %c0_i32_0 = arith.constant 0 : i32
    %c0_i32_1 = arith.constant 0 : i32
    return %c0_i32, %c0_i32_0 : i32, i32
  }
  func.func @transform_3(%arg0: i32) -> (i32, i32) {
    %c0_i32 = arith.constant 0 : i32
    %c0_i32_0 = arith.constant 0 : i32
    %c0_i32_1 = arith.constant 0 : i32
    return %c0_i32, %c0_i32_0 : i32, i32
  }
  func.func @transform_4(%arg0: i32) -> (i32, i32) {
    %c0_i32 = arith.constant 0 : i32
    %c0_i32_0 = arith.constant 0 : i32
    %c0_i32_1 = arith.constant 0 : i32
    return %c0_i32, %c0_i32_0 : i32, i32
  }
  func.func @transform_5(%arg0: i32) -> (i32, i32, i32) {
    %c0_i32 = arith.constant 0 : i32
    %c0_i32_0 = arith.constant 0 : i32
    %c0_i32_1 = arith.constant 0 : i32
    return %arg0, %c0_i32, %c0_i32_0 : i32, i32, i32
  }
}

</mosaic_0001>

<llo_original>
// kernel: tpu_custom_call.1
$region0: #{tpu_custom_call.1}
  #allocation0 [shape = 'u32[]', space=smem, size = 0x4, offset = 0x4, fixed_abs, tag = 'smem constant byte address 0x4 - core index']
  #allocation1 [shape = 'u32[144,128]{1,0:T(1,128)}', space=vmem, size = 0x12000, scoped, tag = 'internal scratch']
  #allocation2 [shape = 'bf16[36,288]{1,0:T(8,128)(2,1)}', space=vmem, size = 0x7800, scoped, tag = 'scratch operand']
  #allocation3 [shape = 'bf16[8,326]{1,0:T(8,128)(2,1)}', space=vmem, size = 0x1800, scoped, tag = 'scratch operand']
  #allocation4 [shape = 'bf16[72,288]{1,0:T(8,128)(2,1)}', space=vmem, size = 0xd800, scoped, tag = 'scratch operand']
  %s0 = inlined_call_operand.vmem [shape: bf16[2,4,384], index: 0, kind: input, shape index: {}]
  %s1 = inlined_call_operand.vmem [shape: bf16[8,36], index: 1, kind: input, shape index: {}]
  %s2 = inlined_call_operand.vmem [shape: f32[8,1], index: 2, kind: input, shape index: {}]
  %s3 = inlined_call_operand.vmem [shape: bf16[8,72], index: 3, kind: input, shape index: {}]
  %s4 = inlined_call_operand.vmem [shape: f32[8,1], index: 4, kind: input, shape index: {}]
  %s5 = inlined_call_operand.hbm [shape: bf16[2,8,288], index: 5, kind: output, shape index: {}]
  %s6 = sld [smem:[#allocation0]]
  $region53: #{tpu_custom_call.1} parent=0
    _
  %s8 = ssub.s32 1, %s6
  %s9 = scalar_select 0, %s8, %s6
  $region1: #{tpu_custom_call.1} parent=0
    #allocation5 [shape = 'u8[12288]{0}', space=vmem, size = 0x3000, scoped, tag = 'output window, operand 0']
    #allocation6 [shape = 's32[2]{0}', space=sflag, size = 0x8, scoped, tag = 'scoped memory for tpu_custom_call.1']
    %10 = vsyncpa [#allocation6], 0
    %s11 = scalar_lea.sflag [#allocation6], 1
    %12 = vsyncpa %s11, 0
    loop: start=0, step=1, limit=4
    $region2: #{tpu_custom_call.1} parent=1 // loop_pre_header
      _
    $region3: #{tpu_custom_call.1} parent=1 // loop_header
      %s14 = sphi 0, %s18
      %p15 = scmp.ge.s32.totalorder %s14, 4
      %s24 = sphi 0, %s26
      %s27 = sphi 0, %s24
      %s28 = sphi 0, %s27
      %s44 = sphi 0, %s28
      %s48 = sphi 0, %s48
      %s50 = sphi 0, %s48
      %s51 = sphi 0, %s50
      %s65 = sphi 0, %s51
      %s69 = sphi 0, %s69
      %s71 = sphi 0, %s69
      %s72 = sphi 0, %s71
      %s86 = sphi 0, %s72
      %s90 = sphi 0, %s90
      %s92 = sphi 0, %s90
      %s93 = sphi 0, %s92
      %s107 = sphi 0, %s93
      %s111 = sphi 0, %s111
      %s113 = sphi 0, %s111
      %s114 = sphi 0, %s113
      %s128 = sphi 0, %s114
      %s134 = sphi 0, %s136
      %s137 = sphi 0, %s134
      %s138 = sphi 0, %s137
      %s154 = sphi 0, %s138
    $region4: #{tpu_custom_call.1} parent=1 // loop_header_branch
      %17 = sbr.rel (%p15) target = $region8
    $region5: #{tpu_custom_call.1} parent=1 // loop_body
      %s19 = ssub.s32 %s14, 1
      %s20 = ssub.s32 %s14, 2
      %s21 = sadd.s32 %s14, 1
      %s22 = ssub.s32 %s14, %s21
      %p23 = scmp.eq.s32.totalorder %s22, 0
      %s25 = sadd.s32 %s24, 1
      %s26 = scalar_select %p23, %s24, %s25
      %p29 = pneg %p23
      %p30 = scmp.eq.s32.totalorder %s14, 1
      %p31 = por %p29, %p30
      %p32 = scmp.ne.s32.totalorder %s24, %s27
      %p33 = scmp.eq.s32.totalorder %s14, 0
      %p34 = por %p32, %p33
      %p35 = scmp.ne.s32.totalorder %s24, %s27
      %p36 = scmp.eq.s32.totalorder %s19, 1
      %p37 = por %p35, %p36
      %p38 = scmp.ne.s32.totalorder %s27, %s28
      %p39 = scmp.eq.s32.totalorder %s19, 0
      %p40 = por %p38, %p39
      %p41 = scmp.ne.s32.totalorder %s27, %s28
      %p42 = scmp.eq.s32.totalorder %s20, 1
      %p43 = por %p41, %p42
      %p45 = scmp.ne.s32.totalorder %s28, %s44
      %p46 = scmp.eq.s32.totalorder %s20, 0
      %p47 = por %p45, %p46
      %s49 = sadd.s32 %s48, 1
      %p52 = scmp.eq.s32.totalorder %s14, 1
      %p53 = scmp.ne.s32.totalorder %s48, %s50
      %p54 = scmp.eq.s32.totalorder %s14, 0
      %p55 = por %p53, %p54
      %p56 = scmp.ne.s32.totalorder %s48, %s50
      %p57 = scmp.eq.s32.totalorder %s19, 1
      %p58 = por %p56, %p57
      %p59 = scmp.ne.s32.totalorder %s50, %s51
      %p60 = scmp.eq.s32.totalorder %s19, 0
      %p61 = por %p59, %p60
      %p62 = scmp.ne.s32.totalorder %s50, %s51
      %p63 = scmp.eq.s32.totalorder %s20, 1
      %p64 = por %p62, %p63
      %p66 = scmp.ne.s32.totalorder %s51, %s65
      %p67 = scmp.eq.s32.totalorder %s20, 0
      %p68 = por %p66, %p67
      %s70 = sadd.s32 %s69, 1
      %p73 = scmp.eq.s32.totalorder %s14, 1
      %p74 = scmp.ne.s32.totalorder %s69, %s71
      %p75 = scmp.eq.s32.totalorder %s14, 0
      %p76 = por %p74, %p75
      %p77 = scmp.ne.s32.totalorder %s69, %s71
      %p78 = scmp.eq.s32.totalorder %s19, 1
      %p79 = por %p77, %p78
      %p80 = scmp.ne.s32.totalorder %s71, %s72
      %p81 = scmp.eq.s32.totalorder %s19, 0
      %p82 = por %p80, %p81
      %p83 = scmp.ne.s32.totalorder %s71, %s72
      %p84 = scmp.eq.s32.totalorder %s20, 1
      %p85 = por %p83, %p84
      %p87 = scmp.ne.s32.totalorder %s72, %s86
      %p88 = scmp.eq.s32.totalorder %s20, 0
      %p89 = por %p87, %p88
      %s91 = sadd.s32 %s90, 1
      %p94 = scmp.eq.s32.totalorder %s14, 1
      %p95 = scmp.ne.s32.totalorder %s90, %s92
      %p96 = scmp.eq.s32.totalorder %s14, 0
      %p97 = por %p95, %p96
      %p98 = scmp.ne.s32.totalorder %s90, %s92
      %p99 = scmp.eq.s32.totalorder %s19, 1
      %p100 = por %p98, %p99
      %p101 = scmp.ne.s32.totalorder %s92, %s93
      %p102 = scmp.eq.s32.totalorder %s19, 0
      %p103 = por %p101, %p102
      %p104 = scmp.ne.s32.totalorder %s92, %s93
      %p105 = scmp.eq.s32.totalorder %s20, 1
      %p106 = por %p104, %p105
      %p108 = scmp.ne.s32.totalorder %s93, %s107
      %p109 = scmp.eq.s32.totalorder %s20, 0
      %p110 = por %p108, %p109
      %s112 = sadd.s32 %s111, 1
      %p115 = scmp.eq.s32.totalorder %s14, 1
      %p116 = scmp.ne.s32.totalorder %s111, %s113
      %p117 = scmp.eq.s32.totalorder %s14, 0
      %p118 = por %p116, %p117
      %p119 = scmp.ne.s32.totalorder %s111, %s113
      %p120 = scmp.eq.s32.totalorder %s19, 1
      %p121 = por %p119, %p120
      %p122 = scmp.ne.s32.totalorder %s113, %s114
      %p123 = scmp.eq.s32.totalorder %s19, 0
      %p124 = por %p122, %p123
      %p125 = scmp.ne.s32.totalorder %s113, %s114
      %p126 = scmp.eq.s32.totalorder %s20, 1
      %p127 = por %p125, %p126
      %p129 = scmp.ne.s32.totalorder %s114, %s128
      %p130 = scmp.eq.s32.totalorder %s20, 0
      %p131 = por %p129, %p130
      %s132 = ssub.s32 %s14, %s21
      %p133 = scmp.eq.s32.totalorder %s132, 0
      %s135 = sadd.s32 %s134, 1
      %s136 = scalar_select %p133, %s134, %s135
      %p139 = pneg %p133
      %p140 = scmp.eq.s32.totalorder %s14, 1
      %p141 = por %p139, %p140
      %p142 = scmp.ne.s32.totalorder %s134, %s137
      %p143 = scmp.eq.s32.totalorder %s14, 0
      %p144 = por %p142, %p143
      %p145 = scmp.ne.s32.totalorder %s134, %s137
      %p146 = scmp.eq.s32.totalorder %s19, 1
      %p147 = por %p145, %p146
      %p148 = scmp.ne.s32.totalorder %s137, %s138
      %p149 = scmp.eq.s32.totalorder %s19, 0
      %p150 = por %p148, %p149
      %p151 = scmp.ne.s32.totalorder %s137, %s138
      %p152 = scmp.eq.s32.totalorder %s20, 1
      %p153 = por %p151, %p152
      %p155 = scmp.ne.s32.totalorder %s138, %s154
      %p156 = scmp.eq.s32.totalorder %s20, 0
      %p157 = por %p155, %p156
      %p158 = scmp.le.s32.totalorder 1, %s14
      %p159 = scmp.lt.s32.totalorder %s14, 3
      %p160 = pnand %p158, %p159
      %p161 = pneg %p160
      // Predicated region
      $region9: #{tpu_custom_call.1} parent=5 // pred_check
        _
      $region10: #{tpu_custom_call.1} parent=5 // pred_check_branch
        %163 = sbr.rel (%p160) target = $region12
      $region11: #{tpu_custom_call.1} parent=5 // pred_region
        %s164 = ssub.s32 %s14, 1
        // Predicated region
        $region13: #{tpu_custom_call.1} parent=11 // pred_check
          %p165 = pneg %p61
        $region14: #{tpu_custom_call.1} parent=11 // pred_check_branch
          %167 = sbr.rel (%p165) target = $region16
        $region15: #{tpu_custom_call.1} parent=11 // pred_region
          _
        $region16: #{tpu_custom_call.1} parent=11 // pred_fallthru
          _
        // Predicated region
        $region17: #{tpu_custom_call.1} parent=11 // pred_check
          %p168 = pneg %p82
        $region18: #{tpu_custom_call.1} parent=11 // pred_check_branch
          %170 = sbr.rel (%p168) target = $region20
        $region19: #{tpu_custom_call.1} parent=11 // pred_region
          _
        $region20: #{tpu_custom_call.1} parent=11 // pred_fallthru
          _
        // Predicated region
        $region21: #{tpu_custom_call.1} parent=11 // pred_check
          %p171 = pneg %p103
        $region22: #{tpu_custom_call.1} parent=11 // pred_check_branch
          %173 = sbr.rel (%p171) target = $region24
        $region23: #{tpu_custom_call.1} parent=11 // pred_region
          _
        $region24: #{tpu_custom_call.1} parent=11 // pred_fallthru
          _
        // Predicated region
        $region25: #{tpu_custom_call.1} parent=11 // pred_check
          %p174 = pneg %p124
        $region26: #{tpu_custom_call.1} parent=11 // pred_check_branch
          %176 = sbr.rel (%p174) target = $region28
        $region27: #{tpu_custom_call.1} parent=11 // pred_region
          _
        $region28: #{tpu_custom_call.1} parent=11 // pred_fallthru
          _
      $region12: #{tpu_custom_call.1} parent=5 // pred_fallthru
        _
      %p177 = scmp.lt.s32.totalorder %s14, 2
      // Predicated region
      $region29: #{tpu_custom_call.1} parent=5 // pred_check
        %p178 = pneg %p177
      $region30: #{tpu_custom_call.1} parent=5 // pred_check_branch
        %180 = sbr.rel (%p178) target = $region32
      $region31: #{tpu_custom_call.1} parent=5 // pred_region
        // Predicated region
        $region33: #{tpu_custom_call.1} parent=31 // pred_check
          %p181 = pneg %p34
        $region34: #{tpu_custom_call.1} parent=31 // pred_check_branch
          %183 = sbr.rel (%p181) target = $region36
        $region35: #{tpu_custom_call.1} parent=31 // pred_region
          %p184 = scmp.lt.s32.totalorder %s14, 1
          %s185 = scalar_select %p184, %s14, 1
          %s186 = smul.addr %s185, 3
          %s187 = smul.addr %s186, 2
          %s188 = scalar_lea.vmem %s0, %s187
        $region36: #{tpu_custom_call.1} parent=31 // pred_fallthru
          _
      $region32: #{tpu_custom_call.1} parent=5 // pred_fallthru
        _
      %p189 = scmp.le.s32.totalorder 1, %s14
      %p190 = scmp.lt.s32.totalorder %s14, 3
      %p191 = pnand %p189, %p190
      %p192 = pneg %p191
      // Predicated region
      $region37: #{tpu_custom_call.1} parent=5 // pred_check
        _
      $region38: #{tpu_custom_call.1} parent=5 // pred_check_branch
        %194 = sbr.rel (%p191) target = $region40
      $region39: #{tpu_custom_call.1} parent=5 // pred_region
        %s195 = ssub.s32 %s14, 1
        %p196 = scmp.lt.s32.totalorder %s19, 1
        %s197 = scalar_select %p196, %s19, 1
        %s198 = smul.addr %s197, 3
        %s199 = smul.addr %s198, 2
        %s200 = scalar_lea.vmem %s0, %s199
        %p201 = pneg %p40
        %p202 = pneg %p37
        %p203 = pneg %p61
        %p204 = pneg %p58
        %p205 = pneg %p82
        %p206 = pneg %p79
        %p207 = pneg %p103
        %p208 = pneg %p100
        %p209 = pneg %p124
        %p210 = pneg %p121
        %p211 = pneg %p150
        %p212 = pneg %p147
        %s213 = sand.u32 %s137, 1
        %s214 = scalar_lea.sflag [#allocation6], %s213
        %s215 = sand.u32 %s137, 1
        %s216 = smul.addr %s215, 12
        %s217 = scalar_lea.vmem [#allocation5], %s216
        %p218 = scmp.lt.s32.totalorder %s19, 1
        %s219 = scalar_select %p218, %s19, 1
        %s220 = smul.addr %s219, 3
        %s221 = smul.addr %s220, 2
        %s222 = scalar_lea.vmem %s0, %s221
        %v224 = vld [vmem:[%s222] sm:$0x3f]
        %v226 = vcombine.high %v224, %v224
        %v228 = vunpack.c.l.s4 1983009808
        %v229 = vunpack.c.0.s8 %v228
        %v230 = vlaneseq
        %v231 = vshrl.u32 %v230, 7
        %v232 = vsub.s32 %v229, %v231
        %v233 = vrot.slane %v224, %v232
        %v235 = vunpack.c.l.s4 1983009808
        %v236 = vunpack.c.0.s8 %v235
        %v237 = vlaneseq
        %v238 = vshrl.u32 %v237, 7
        %v239 = vsub.s32 %v236, %v238
        %v240 = vrot.slane %v226, %v239
        %243 = vst [vmem:[#allocation2] sm:$0x33] %v233
        %vm244 = vcmask 254976
        %245 = vst.msk [vmem:[#allocation2 + $0x8] sm:$0x3] %vm244, %v240
        %v246 = vld [vmem:[%s222] sm:$0x3f]
        %v248 = vcombine.low %v246, %v246
        %v250 = vunpack.c.l.s4 1983009808
        %v251 = vunpack.c.0.s8 %v250
        %v252 = vlaneseq
        %v253 = vshrl.u32 %v252, 7
        %v254 = vsub.s32 %v251, %v253
        %v255 = vrot.slane %v248, %v254
        %v257 = vunpack.c.l.s4 1983009808
        %v258 = vunpack.c.0.s8 %v257
        %v259 = vlaneseq
        %v260 = vshrl.u32 %v259, 7
        %v261 = vsub.s32 %v258, %v260
        %v262 = vrot.slane %v246, %v261
        %263 = vrot.lane.b32.xlu0 %v255, 127
        %v264 = vpop.permute.xlu0 %263
        %265 = vrot.lane.b32.xlu0 %v262, 127
        %v266 = vpop.permute.xlu0 %265
        %v267 = vrot.slane %v264, 4
        %v268 = vrot.slane %v266, 4
        %vm269 = vcmask 1043456
        %v270 = vsel %vm269, %v267, %v268
        %vm271 = vcmask 1039360
        %v272 = vsel %vm271, %v264, %v270
        %275 = vst [vmem:[#allocation2] sm:$0xcc] %v272
        %vm276 = vcmask 257026
        %277 = vst.msk [vmem:[#allocation2 + $0x8] sm:$0xc] %vm276, %v266
        %v278 = vld [vmem:[%s222] sm:$0x3f]
        %v280 = vcombine.high %v278, %v278
        %v282 = vunpack.c.l.s4 1983009808
        %v283 = vunpack.c.0.s8 %v282
        %v284 = vlaneseq
        %v285 = vshrl.u32 %v284, 7
        %v286 = vsub.s32 %v283, %v285
        %v287 = vrot.slane %v278, %v286
        %v289 = vunpack.c.l.s4 1983009808
        %v290 = vunpack.c.0.s8 %v289
        %v291 = vlaneseq
        %v292 = vshrl.u32 %v291, 7
        %v293 = vsub.s32 %v290, %v292
        %v294 = vrot.slane %v280, %v293
        %295 = vrot.lane.b32.xlu0 %v287, 126
        %v296 = vpop.permute.xlu0 %295
        %297 = vrot.lane.b32.xlu0 %v294, 126
        %v298 = vpop.permute.xlu0 %297
        %v299 = vrot.slane %v296, 4
        %v300 = vrot.slane %v298, 4
        %v301 = vsel %vm269, %v299, %v300
        %vm302 = vcmask 1031168
        %v303 = vsel %vm302, %v296, %v301
        %306 = vst [vmem:[#allocation2 + $0xc] sm:$0x33] %v303
        %307 = vst.msk [vmem:[#allocation2 + $0x14] sm:$0x3] %vm244, %v298
        %v308 = vld [vmem:[%s222] sm:$0x3f]
        %v310 = vcombine.low %v308, %v308
        %v312 = vunpack.c.l.s4 1983009808
        %v313 = vunpack.c.0.s8 %v312
        %v314 = vlaneseq
        %v315 = vshrl.u32 %v314, 7
        %v316 = vsub.s32 %v313, %v315
        %v317 = vrot.slane %v310, %v316
        %v319 = vunpack.c.l.s4 1983009808
        %v320 = vunpack.c.0.s8 %v319
        %v321 = vlaneseq
        %v322 = vshrl.u32 %v321, 7
        %v323 = vsub.s32 %v320, %v322
        %v324 = vrot.slane %v308, %v323
        %325 = vrot.lane.b32.xlu0 %v317, 110
        %v326 = vpop.permute.xlu0 %325
        %327 = vrot.lane.b32.xlu0 %v324, 110
        %v328 = vpop.permute.xlu0 %327
        %v329 = vrot.slane %v326, 4
        %v330 = vrot.slane %v328, 4
        %v331 = vsel %vm269, %v329, %v330
        %vm332 = vcmask 900096
        %v333 = vsel %vm332, %v326, %v331
        %336 = vst [vmem:[#allocation2 + $0xc] sm:$0xcc] %v333
        %337 = vst.msk [vmem:[#allocation2 + $0x14] sm:$0xc] %vm276, %v328
        %v338 = vld [vmem:[%s222] sm:$0x3f]
        %v340 = vcombine.high %v338, %v338
        %v342 = vunpack.c.l.s4 1983009808
        %v343 = vunpack.c.0.s8 %v342
        %v344 = vlaneseq
        %v345 = vshrl.u32 %v344, 7
        %v346 = vsub.s32 %v343, %v345
        %v347 = vrot.slane %v338, %v346
        %v349 = vunpack.c.l.s4 1983009808
        %v350 = vunpack.c.0.s8 %v349
        %v351 = vlaneseq
        %v352 = vshrl.u32 %v351, 7
        %v353 = vsub.s32 %v350, %v352
        %v354 = vrot.slane %v340, %v353
        %355 = vrot.lane.b32.xlu0 %v347, 109
        %v356 = vpop.permute.xlu0 %355
        %357 = vrot.lane.b32.xlu0 %v354, 109
        %v358 = vpop.permute.xlu0 %357
        %v359 = vrot.slane %v356, 4
        %v360 = vrot.slane %v358, 4
        %v361 = vsel %vm269, %v359, %v360
        %vm362 = vcmask 891904
        %v363 = vsel %vm362, %v356, %v361
        %366 = vst [vmem:[#allocation2 + $0x18] sm:$0x33] %v363
        %367 = vst.msk [vmem:[#allocation2 + $0x20] sm:$0x3] %vm244, %v358
        %v368 = vld [vmem:[%s222] sm:$0x3f]
        %v370 = vcombine.low %v368, %v368
        %v372 = vunpack.c.l.s4 1983009808
        %v373 = vunpack.c.0.s8 %v372
        %v374 = vlaneseq
        %v375 = vshrl.u32 %v374, 7
        %v376 = vsub.s32 %v373, %v375
        %v377 = vrot.slane %v370, %v376
        %v379 = vunpack.c.l.s4 1983009808
        %v380 = vunpack.c.0.s8 %v379
        %v381 = vlaneseq
        %v382 = vshrl.u32 %v381, 7
        %v383 = vsub.s32 %v380, %v382
        %v384 = vrot.slane %v368, %v383
        %385 = vrot.lane.b32.xlu0 %v377, 108
        %v386 = vpop.permute.xlu0 %385
        %387 = vrot.lane.b32.xlu0 %v384, 108
        %v388 = vpop.permute.xlu0 %387
        %v389 = vrot.slane %v386, 4
        %v390 = vrot.slane %v388, 4
        %v391 = vsel %vm269, %v389, %v390
        %vm392 = vcmask 883712
        %v393 = vsel %vm392, %v386, %v391
        %396 = vst [vmem:[#allocation2 + $0x18] sm:$0xcc] %v393
        %397 = vst.msk [vmem:[#allocation2 + $0x20] sm:$0xc] %vm276, %v388
        %v398 = vld [vmem:[%s222] sm:$0x3f]
        %v400 = vcombine.high %v398, %v398
        %v402 = vunpack.c.l.s4 1983009808
        %v403 = vunpack.c.0.s8 %v402
        %v404 = vlaneseq
        %v405 = vshrl.u32 %v404, 7
        %v406 = vsub.s32 %v403, %v405
        %v407 = vrot.slane %v398, %v406
        %v409 = vunpack.c.l.s4 1983009808
        %v410 = vunpack.c.0.s8 %v409
        %v411 = vlaneseq
        %v412 = vshrl.u32 %v411, 7
        %v413 = vsub.s32 %v410, %v412
        %v414 = vrot.slane %v400, %v413
        %415 = vrot.lane.b32.xlu0 %v407, 92
        %v416 = vpop.permute.xlu0 %415
        %417 = vrot.lane.b32.xlu0 %v414, 92
        %v418 = vpop.permute.xlu0 %417
        %v419 = vrot.slane %v416, 4
        %v420 = vrot.slane %v418, 4
        %v421 = vsel %vm269, %v419, %v420
        %vm422 = vcmask 752640
        %v423 = vsel %vm422, %v416, %v421
        %426 = vst [vmem:[#allocation2 + $0x24] sm:$0x33] %v423
        %427 = vst.msk [vmem:[#allocation2 + $0x2c] sm:$0x3] %vm244, %v418
        %v428 = vld [vmem:[%s222] sm:$0x3f]
        %v430 = vcombine.low %v428, %v428
        %v432 = vunpack.c.l.s4 1983009808
        %v433 = vunpack.c.0.s8 %v432
        %v434 = vlaneseq
        %v435 = vshrl.u32 %v434, 7
        %v436 = vsub.s32 %v433, %v435
        %v437 = vrot.slane %v430, %v436
        %v439 = vunpack.c.l.s4 1983009808
        %v440 = vunpack.c.0.s8 %v439
        %v441 = vlaneseq
        %v442 = vshrl.u32 %v441, 7
        %v443 = vsub.s32 %v440, %v442
        %v444 = vrot.slane %v428, %v443
        %445 = vrot.lane.b32.xlu0 %v437, 91
        %v446 = vpop.permute.xlu0 %445
        %447 = vrot.lane.b32.xlu0 %v444, 91
        %v448 = vpop.permute.xlu0 %447
        %v449 = vrot.slane %v446, 4
        %v450 = vrot.slane %v448, 4
        %v451 = vsel %vm269, %v449, %v450
        %vm452 = vcmask 744448
        %v453 = vsel %vm452, %v446, %v451
        %456 = vst [vmem:[#allocation2 + $0x24] sm:$0xcc] %v453
        %457 = vst.msk [vmem:[#allocation2 + $0x2c] sm:$0xc] %vm276, %v448
        %v458 = vld [vmem:[%s222] sm:$0x3f]
        %v460 = vcombine.high %v458, %v458
        %v462 = vunpack.c.l.s4 1983009808
        %v463 = vunpack.c.0.s8 %v462
        %v464 = vlaneseq
        %v465 = vshrl.u32 %v464, 7
        %v466 = vsub.s32 %v463, %v465
        %v467 = vrot.slane %v458, %v466
        %v469 = vunpack.c.l.s4 1983009808
        %v470 = vunpack.c.0.s8 %v469
        %v471 = vlaneseq
        %v472 = vshrl.u32 %v471, 7
        %v473 = vsub.s32 %v470, %v472
        %v474 = vrot.slane %v460, %v473
        %475 = vrot.lane.b32.xlu0 %v467, 90
        %v476 = vpop.permute.xlu0 %475
        %477 = vrot.lane.b32.xlu0 %v474, 90
        %v478 = vpop.permute.xlu0 %477
        %v479 = vrot.slane %v476, 4
        %v480 = vrot.slane %v478, 4
        %v481 = vsel %vm269, %v479, %v480
        %vm482 = vcmask 736256
        %v483 = vsel %vm482, %v476, %v481
        %486 = vst [vmem:[#allocation2 + $0x30] sm:$0x33] %v483
        %487 = vst.msk [vmem:[#allocation2 + $0x38] sm:$0x3] %vm244, %v478
        %v488 = vld [vmem:[%s1] sm:$0xf]
        %v489 = vld [vmem:[#allocation2] sm:$0xff]
        %v490 = vld [vmem:[#allocation2 + $0x8] sm:$0xf]
        %v491 = vld [vmem:[#allocation2 + $0xc] sm:$0xff]
        %v492 = vld [vmem:[#allocation2 + $0x14] sm:$0xf]
        %v493 = vld [vmem:[#allocation2 + $0x18] sm:$0xff]
        %v494 = vld [vmem:[#allocation2 + $0x20] sm:$0xf]
        %v495 = vld [vmem:[#allocation2 + $0x24] sm:$0xff]
        %v496 = vld [vmem:[#allocation2 + $0x2c] sm:$0xf]
        %v497 = vld [vmem:[#allocation2 + $0x30] sm:$0x33]
        %v498 = vld [vmem:[#allocation2 + $0x38] sm:$0x3]
        %v499 = vld [vmem:[%s2] sm:$0xff]
        %501 = vset.pattern.permute.xlu0 0
        %502 = vperm.xlu0 %501, %v499
        %v503 = vpop.permute.xlu0 %502
        %v515 = vunpack.c.l.b16 %v489
        %v516 = vunpack.c.h.b16 %v489
        %v517 = vunpack.c.l.b16 %v490
        %v518 = vunpack.c.l.b16 %v491
        %v519 = vunpack.c.h.b16 %v491
        %v520 = vunpack.c.l.b16 %v492
        %v521 = vunpack.c.l.b16 %v493
        %v522 = vunpack.c.h.b16 %v493
        %v523 = vunpack.c.l.b16 %v494
        %v524 = vunpack.c.l.b16 %v495
        %v525 = vunpack.c.h.b16 %v495
        %v526 = vunpack.c.l.b16 %v496
        %v527 = vunpack.c.l.b16 %v497
        %v528 = vunpack.c.h.b16 %v497
        %v529 = vunpack.c.l.b16 %v498
        %v530 = vpack.c.b16 %v518, %v515
        %v531 = vpack.c.b16 %v519, %v516
        %v532 = vpack.c.b16 %v520, %v517
        %v533 = vpack.c.b16 %v524, %v521
        %v534 = vpack.c.b16 %v525, %v522
        %v535 = vpack.c.b16 %v526, %v523
        %v536 = vpack.c.b16 %v527, %v527
        %v537 = vpack.c.b16 %v528, %v528
        %v538 = vpack.c.b16 %v529, %v529
        %vm545 = vcmask 293888
        %v547 = vsel %vm545, %v488, 0
        %vm549 = vcmask 1041408
        %v551 = vsel %vm549, %v536, 0
        %v554 = vsel %vm549, %v537, 0
        %v557 = vsel %vm549, %v538, 0
        %559 = vmatprep.subr.bf16.mxu0 0
        %560 = vmatpush1.bf16.msra.mxu0 0
        %561 = vmatprep.subr.bf16.mxu0 0
        %562 = vmatpush1.bf16.msra.mxu0 0
        %563 = vmatprep.subr.bf16.mxu0 0
        %564 = vmatpush1.bf16.msra.mxu0 0
        %565 = vmatprep.subr.bf16.mxu0 0
        %566 = vmatpush1.bf16.msra.mxu0 0
        %567 = vmatprep.subr.bf16.mxu0 0
        %568 = vmatpush1.bf16.msra.mxu0 0
        %569 = vmatprep.subr.bf16.mxu0 %v554
        %570 = vmatpush1.bf16.msra.mxu0 %v551
        %571 = vmatprep.subr.bf16.mxu0 %v534
        %572 = vmatpush1.bf16.msra.mxu0 %v533
        %573 = vmatprep.subr.bf16.mxu0 %v531
        %574 = vmatpush1.bf16.msra.mxu0 %v530
        %575 = vmatprep.subr.bf16.mxu0 0
        %576 = vmatpush2.bf16.msra.mxu0 0
        %577 = vmatprep.subr.bf16.mxu0 0
        %578 = vmatpush2.bf16.msra.mxu0 0
        %579 = vmatprep.subr.bf16.mxu0 0
        %580 = vmatpush2.bf16.msra.mxu0 0
        %581 = vmatprep.subr.bf16.mxu0 0
        %582 = vmatpush2.bf16.msra.mxu0 0
        %583 = vmatprep.subr.bf16.mxu0 0
        %584 = vmatpush2.bf16.msra.mxu0 0
        %585 = vmatprep.subr.bf16.mxu0 0
        %586 = vmatpush2.bf16.msra.mxu0 0
        %587 = vmatprep.subr.bf16.mxu0 0
        %588 = vmatpush2.bf16.msra.mxu0 0
        %589 = vmatprep.subr.bf16.mxu0 0
        %590 = vmatpush2.bf16.msra.mxu0 0
        %591 = vmatprep.mubr.bf16.mxu0 0
        %592 = vmatmul.mubr.bf16.gmra.mxu0 %v547
        %v593 = vpop.f32.mrf.mxu0
        %v594 = vadd.f32 %v503, %v593
        %v595 = vpop.f32.mrf.mxu0
        %v596 = vadd.f32 %v503, %v595
        %v597 = vpop.f32.mrf.mxu0
        %v598 = vpop.f32.mrf.mxu0
        %599 = vdwg.mxu0
        %600 = vmatprep.subr.bf16.mxu0 0
        %601 = vmatpush1.bf16.msra.mxu0 0
        %602 = vmatprep.subr.bf16.mxu0 0
        %603 = vmatpush1.bf16.msra.mxu0 0
        %604 = vmatprep.subr.bf16.mxu0 0
        %605 = vmatpush1.bf16.msra.mxu0 0
        %606 = vmatprep.subr.bf16.mxu0 0
        %607 = vmatpush1.bf16.msra.mxu0 0
        %608 = vmatprep.subr.bf16.mxu0 0
        %609 = vmatpush1.bf16.msra.mxu0 0
        %610 = vmatprep.subr.bf16.mxu0 0
        %611 = vmatpush1.bf16.msra.mxu0 %v557
        %612 = vmatprep.subr.bf16.mxu0 0
        %613 = vmatpush1.bf16.msra.mxu0 %v535
        %614 = vmatprep.subr.bf16.mxu0 0
        %615 = vmatpush1.bf16.msra.mxu0 %v532
        %616 = vmatprep.subr.bf16.mxu0 0
        %617 = vmatpush2.bf16.msra.mxu0 0
        %618 = vmatprep.subr.bf16.mxu0 0
        %619 = vmatpush2.bf16.msra.mxu0 0
        %620 = vmatprep.subr.bf16.mxu0 0
        %621 = vmatpush2.bf16.msra.mxu0 0
        %622 = vmatprep.subr.bf16.mxu0 0
        %623 = vmatpush2.bf16.msra.mxu0 0
        %624 = vmatprep.subr.bf16.mxu0 0
        %625 = vmatpush2.bf16.msra.mxu0 0
        %626 = vmatprep.subr.bf16.mxu0 0
        %627 = vmatpush2.bf16.msra.mxu0 0
        %628 = vmatprep.subr.bf16.mxu0 0
        %629 = vmatpush2.bf16.msra.mxu0 0
        %630 = vmatprep.subr.bf16.mxu0 0
        %631 = vmatpush2.bf16.msra.mxu0 0
        %632 = vmatprep.mubr.bf16.mxu0 0
        %633 = vmatmul.mubr.bf16.gmra.mxu0 %v547
        %v634 = vpop.f32.mrf.mxu0
        %v635 = vadd.f32 %v503, %v634
        %v636 = vpop.f32.mrf.mxu0
        %v637 = vpop.f32.mrf.mxu0
        %v638 = vpop.f32.mrf.mxu0
        %639 = vdwg.mxu0
        %vm640 = vcmp.ge.f32.partialorder %v594, 0.0
        %vm641 = vcmp.ge.f32.partialorder %v596, 0.0
        %vm642 = vcmp.ge.f32.partialorder %v635, 0.0
        %v643 = vmul.f32 %v594, 0.2
        %v644 = vmul.f32 %v596, 0.2
        %v645 = vmul.f32 %v635, 0.2
        %v646 = vsel %vm640, %v594, %v643
        %v647 = vsel %vm641, %v596, %v644
        %v648 = vsel %vm642, %v635, %v645
        %v649 = vlaneseq
        %v650 = vand.u32 %v649, 127
        %v651 = vadd.s32 %v650, 128
        %v652 = vadd.s32 %v650, 256
        %v653 = vcvt.s32.f32 %v650
        %v654 = vcvt.s32.f32 %v651
        %v655 = vcvt.s32.f32 %v652
        %v656 = vadd.f32 %v653, 0.5
        %v657 = vadd.f32 %v654, 0.5
        %v658 = vadd.f32 %v655, 0.5
        %v659 = vmul.f32 %v656, 0.055555556
        %v660 = vmul.f32 %v657, 0.055555556
        %v661 = vmul.f32 %v658, 0.055555556
        %v662 = vfloor.f32 %v659
        %v663 = vfloor.f32 %v660
        %v664 = vfloor.f32 %v661
        %v665 = vmul.f32 %v662, 18.0
        %v666 = vmul.f32 %v663, 18.0
        %v667 = vmul.f32 %v664, 18.0
        %v668 = vsub.f32 %v653, %v665
        %v669 = vsub.f32 %v654, %v666
        %v670 = vsub.f32 %v655, %v667
        %vm671 = vcmp.lt.f32.partialorder %v668, 15.5
        %vm672 = vcmp.lt.f32.partialorder %v669, 15.5
        %vm673 = vcmp.lt.f32.partialorder %v670, 15.5
        %v674 = vsel %vm671, 1, 0
        %v675 = vsel %vm672, 1, 0
        %v676 = vsel %vm673, 1, 0
        %vm677 = vcmp.eq.s32.totalorder %v674, 1
        %vm678 = vcmp.eq.s32.totalorder %v675, 1
        %vm679 = vcmp.eq.s32.totalorder %v676, 1
        %v680 = vsel %vm677, %v646, 0.0
        %v681 = vsel %vm678, %v647, 0.0
        %v682 = vsel %vm679, %v648, 0.0
        %v683 = vpack.c.bf16 %v680, %v680
        %v684 = vpack.c.bf16 %v681, %v681
        %v685 = vpack.c.bf16 %v682, %v682
        %vm686 = vcmask 150528
        %687 = vst.msk [vmem:[#allocation3] sm:$0xf] %vm686, 0
        %vm688 = vcmask 568728
        %689 = vst.msk [vmem:[#allocation3 + $0x8] sm:$0xf] %vm688, 0
        %v693 = vunpack.c.l.b16 %v683
        %v694 = vunpack.c.l.b16 %v684
        %v695 = vunpack.c.l.b16 %v685
        %v696 = vpack.c.b16 %v694, %v693
        %v697 = vpack.c.b16 %v695, %v695
        %698 = vrot.lane.b32.xlu0 %v696, 19
        %v699 = vpop.permute.xlu0 %698
        %700 = vrot.lane.b32.xlu0 %v697, 19
        %v701 = vpop.permute.xlu0 %700
        %v702 = vrot.slane %v699, 4
        %vm703 = vcmask 154624
        %v704 = vsel %vm703, %v702, %v699
        %v705 = vsel %vm703, %v702, %v701
        %vm708 = vcmask 1043608
        %vm709 = vcmask 1047556
        %vm710 = vmor %vm709, %vm708
        %711 = vst.msk [vmem:[#allocation3] sm:$0xff] %vm710, %v704
        %vm712 = vcmask 412672
        %713 = vst.msk [vmem:[#allocation3 + $0x8] sm:$0xf] %vm712, %v705
        %v714 = vld [vmem:[#allocation3] sm:$0xff]
        %v715 = vld [vmem:[#allocation3 + $0x8] sm:$0xf]
        %716 = vst [vmem:[#allocation4] sm:$0xff] %v714
        %vm717 = vcmask 257024
        %718 = vst.msk [vmem:[#allocation4 + $0x8] sm:$0xf] %vm717, %v715
        %v719 = vld [vmem:[#allocation3] sm:$0xff]
        %v720 = vld [vmem:[#allocation3 + $0x8] sm:$0xf]
        %723 = vrot.lane.b32.xlu0 %v719, 127
        %v724 = vpop.permute.xlu0 %723
        %725 = vrot.lane.b32.xlu0 %v720, 127
        %v726 = vpop.permute.xlu0 %725
        %v727 = vrot.slane %v724, 4
        %v728 = vrot.slane %v726, 4
        %v729 = vsel %vm269, %v727, %v728
        %v730 = vsel %vm271, %v724, %v729
        %733 = vst [vmem:[#allocation4 + $0xc] sm:$0xff] %v730
        %734 = vst.msk [vmem:[#allocation4 + $0x14] sm:$0xf] %vm717, %v726
        %v735 = vld [vmem:[#allocation3] sm:$0xff]
        %v736 = vld [vmem:[#allocation3 + $0x8] sm:$0xf]
        %739 = vrot.lane.b32.xlu0 %v735, 126
        %v740 = vpop.permute.xlu0 %739
        %741 = vrot.lane.b32.xlu0 %v736, 126
        %v742 = vpop.permute.xlu0 %741
        %v743 = vrot.slane %v740, 4
        %v744 = vrot.slane %v742, 4
        %v745 = vsel %vm269, %v743, %v744
        %v746 = vsel %vm302, %v740, %v745
        %749 = vst [vmem:[#allocation4 + $0x18] sm:$0xff] %v746
        %750 = vst.msk [vmem:[#allocation4 + $0x20] sm:$0xf] %vm717, %v742
        %v751 = vld [vmem:[#allocation3] sm:$0xff]
        %v752 = vld [vmem:[#allocation3 + $0x8] sm:$0xf]
        %755 = vrot.lane.b32.xlu0 %v751, 110
        %v756 = vpop.permute.xlu0 %755
        %757 = vrot.lane.b32.xlu0 %v752, 110
        %v758 = vpop.permute.xlu0 %757
        %v759 = vrot.slane %v756, 4
        %v760 = vrot.slane %v758, 4
        %v761 = vsel %vm269, %v759, %v760
        %v762 = vsel %vm332, %v756, %v761
        %765 = vst [vmem:[#allocation4 + $0x24] sm:$0xff] %v762
        %766 = vst.msk [vmem:[#allocation4 + $0x2c] sm:$0xf] %vm717, %v758
        %v767 = vld [vmem:[#allocation3] sm:$0xff]
        %v768 = vld [vmem:[#allocation3 + $0x8] sm:$0xf]
        %771 = vrot.lane.b32.xlu0 %v767, 109
        %v772 = vpop.permute.xlu0 %771
        %773 = vrot.lane.b32.xlu0 %v768, 109
        %v774 = vpop.permute.xlu0 %773
        %v775 = vrot.slane %v772, 4
        %v776 = vrot.slane %v774, 4
        %v777 = vsel %vm269, %v775, %v776
        %v778 = vsel %vm362, %v772, %v777
        %781 = vst [vmem:[#allocation4 + $0x30] sm:$0xff] %v778
        %782 = vst.msk [vmem:[#allocation4 + $0x38] sm:$0xf] %vm717, %v774
        %v783 = vld [vmem:[#allocation3] sm:$0xff]
        %v784 = vld [vmem:[#allocation3 + $0x8] sm:$0xf]
        %787 = vrot.lane.b32.xlu0 %v783, 108
        %v788 = vpop.permute.xlu0 %787
        %789 = vrot.lane.b32.xlu0 %v784, 108
        %v790 = vpop.permute.xlu0 %789
        %v791 = vrot.slane %v788, 4
        %v792 = vrot.slane %v790, 4
        %v793 = vsel %vm269, %v791, %v792
        %v794 = vsel %vm392, %v788, %v793
        %797 = vst [vmem:[#allocation4 + $0x3c] sm:$0xff] %v794
        %798 = vst.msk [vmem:[#allocation4 + $0x44] sm:$0xf] %vm717, %v790
        %v799 = vld [vmem:[#allocation3] sm:$0xff]
        %v800 = vld [vmem:[#allocation3 + $0x8] sm:$0xf]
        %803 = vrot.lane.b32.xlu0 %v799, 92
        %v804 = vpop.permute.xlu0 %803
        %805 = vrot.lane.b32.xlu0 %v800, 92
        %v806 = vpop.permute.xlu0 %805
        %v807 = vrot.slane %v804, 4
        %v808 = vrot.slane %v806, 4
        %v809 = vsel %vm269, %v807, %v808
        %v810 = vsel %vm422, %v804, %v809
        %813 = vst [vmem:[#allocation4 + $0x48] sm:$0xff] %v810
        %814 = vst.msk [vmem:[#allocation4 + $0x50] sm:$0xf] %vm717, %v806
        %v815 = vld [vmem:[#allocation3] sm:$0xff]
        %v816 = vld [vmem:[#allocation3 + $0x8] sm:$0xf]
        %819 = vrot.lane.b32.xlu0 %v815, 91
        %v820 = vpop.permute.xlu0 %819
        %821 = vrot.lane.b32.xlu0 %v816, 91
        %v822 = vpop.permute.xlu0 %821
        %v823 = vrot.slane %v820, 4
        %v824 = vrot.slane %v822, 4
        %v825 = vsel %vm269, %v823, %v824
        %v826 = vsel %vm452, %v820, %v825
        %829 = vst [vmem:[#allocation4 + $0x54] sm:$0xff] %v826
        %830 = vst.msk [vmem:[#allocation4 + $0x5c] sm:$0xf] %vm717, %v822
        %v831 = vld [vmem:[#allocation3] sm:$0xff]
        %v832 = vld [vmem:[#allocation3 + $0x8] sm:$0xf]
        %835 = vrot.lane.b32.xlu0 %v831, 90
        %v836 = vpop.permute.xlu0 %835
        %837 = vrot.lane.b32.xlu0 %v832, 90
        %v838 = vpop.permute.xlu0 %837
        %v839 = vrot.slane %v836, 4
        %v840 = vrot.slane %v838, 4
        %v841 = vsel %vm269, %v839, %v840
        %v842 = vsel %vm482, %v836, %v841
        %845 = vst [vmem:[#allocation4 + $0x60] sm:$0xff] %v842
        %846 = vst.msk [vmem:[#allocation4 + $0x68] sm:$0xf] %vm717, %v838
        %v847 = vld [vmem:[%s3] sm:$0xf]
        %v848 = vld [vmem:[#allocation4] sm:$0xff]
        %v849 = vld [vmem:[#allocation4 + $0x8] sm:$0xf]
        %v850 = vld [vmem:[#allocation4 + $0xc] sm:$0xff]
        %v851 = vld [vmem:[#allocation4 + $0x14] sm:$0xf]
        %v852 = vld [vmem:[#allocation4 + $0x18] sm:$0xff]
        %v853 = vld [vmem:[#allocation4 + $0x20] sm:$0xf]
        %v854 = vld [vmem:[#allocation4 + $0x24] sm:$0xff]
        %v855 = vld [vmem:[#allocation4 + $0x2c] sm:$0xf]
        %v856 = vld [vmem:[#allocation4 + $0x30] sm:$0xff]
        %v857 = vld [vmem:[#allocation4 + $0x38] sm:$0xf]
        %v858 = vld [vmem:[#allocation4 + $0x3c] sm:$0xff]
        %v859 = vld [vmem:[#allocation4 + $0x44] sm:$0xf]
        %v860 = vld [vmem:[#allocation4 + $0x48] sm:$0xff]
        %v861 = vld [vmem:[#allocation4 + $0x50] sm:$0xf]
        %v862 = vld [vmem:[#allocation4 + $0x54] sm:$0xff]
        %v863 = vld [vmem:[#allocation4 + $0x5c] sm:$0xf]
        %v864 = vld [vmem:[#allocation4 + $0x60] sm:$0xff]
        %v865 = vld [vmem:[#allocation4 + $0x68] sm:$0xf]
        %v866 = vld [vmem:[%s4] sm:$0xff]
        %868 = vset.pattern.permute.xlu0 0
        %869 = vperm.xlu0 %868, %v866
        %v870 = vpop.permute.xlu0 %869
        %v890 = vunpack.c.l.b16 %v848
        %v891 = vunpack.c.h.b16 %v848
        %v892 = vunpack.c.l.b16 %v849
        %v893 = vunpack.c.l.b16 %v850
        %v894 = vunpack.c.h.b16 %v850
        %v895 = vunpack.c.l.b16 %v851
        %v896 = vunpack.c.l.b16 %v852
        %v897 = vunpack.c.h.b16 %v852
        %v898 = vunpack.c.l.b16 %v853
        %v899 = vunpack.c.l.b16 %v854
        %v900 = vunpack.c.h.b16 %v854
        %v901 = vunpack.c.l.b16 %v855
        %v902 = vunpack.c.l.b16 %v856
        %v903 = vunpack.c.h.b16 %v856
        %v904 = vunpack.c.l.b16 %v857
        %v905 = vunpack.c.l.b16 %v858
        %v906 = vunpack.c.h.b16 %v858
        %v907 = vunpack.c.l.b16 %v859
        %v908 = vunpack.c.l.b16 %v860
        %v909 = vunpack.c.h.b16 %v860
        %v910 = vunpack.c.l.b16 %v861
        %v911 = vunpack.c.l.b16 %v862
        %v912 = vunpack.c.h.b16 %v862
        %v913 = vunpack.c.l.b16 %v863
        %v914 = vunpack.c.l.b16 %v864
        %v915 = vunpack.c.h.b16 %v864
        %v916 = vunpack.c.l.b16 %v865
        %v917 = vpack.c.b16 %v893, %v890
        %v918 = vpack.c.b16 %v894, %v891
        %v919 = vpack.c.b16 %v895, %v892
        %v920 = vpack.c.b16 %v899, %v896
        %v921 = vpack.c.b16 %v900, %v897
        %v922 = vpack.c.b16 %v901, %v898
        %v923 = vpack.c.b16 %v905, %v902
        %v924 = vpack.c.b16 %v906, %v903
        %v925 = vpack.c.b16 %v907, %v904
        %v926 = vpack.c.b16 %v911, %v908
        %v927 = vpack.c.b16 %v912, %v909
        %v928 = vpack.c.b16 %v913, %v910
        %v929 = vpack.c.b16 %v914, %v914
        %v930 = vpack.c.b16 %v915, %v915
        %v931 = vpack.c.b16 %v916, %v916
        %vm944 = vcmask 588800
        %v946 = vsel %vm944, %v847, 0
        %vm948 = vcmask 1043456
        %v950 = vsel %vm948, %v929, 0
        %v953 = vsel %vm948, %v930, 0
        %v956 = vsel %vm948, %v931, 0
        %958 = vmatprep.subr.bf16.mxu0 0
        %959 = vmatpush1.bf16.msra.mxu0 0
        %960 = vmatprep.subr.bf16.mxu0 0
        %961 = vmatpush1.bf16.msra.mxu0 0
        %962 = vmatprep.subr.bf16.mxu0 0
        %963 = vmatpush1.bf16.msra.mxu0 0
        %964 = vmatprep.subr.bf16.mxu0 %v953
        %965 = vmatpush1.bf16.msra.mxu0 %v950
        %966 = vmatprep.subr.bf16.mxu0 %v927
        %967 = vmatpush1.bf16.msra.mxu0 %v926
        %968 = vmatprep.subr.bf16.mxu0 %v924
        %969 = vmatpush1.bf16.msra.mxu0 %v923
        %970 = vmatprep.subr.bf16.mxu0 %v921
        %971 = vmatpush1.bf16.msra.mxu0 %v920
        %972 = vmatprep.subr.bf16.mxu0 %v918
        %973 = vmatpush1.bf16.msra.mxu0 %v917
        %974 = vmatprep.subr.bf16.mxu0 0
        %975 = vmatpush2.bf16.msra.mxu0 0
        %976 = vmatprep.subr.bf16.mxu0 0
        %977 = vmatpush2.bf16.msra.mxu0 0
        %978 = vmatprep.subr.bf16.mxu0 0
        %979 = vmatpush2.bf16.msra.mxu0 0
        %980 = vmatprep.subr.bf16.mxu0 0
        %981 = vmatpush2.bf16.msra.mxu0 0
        %982 = vmatprep.subr.bf16.mxu0 0
        %983 = vmatpush2.bf16.msra.mxu0 0
        %984 = vmatprep.subr.bf16.mxu0 0
        %985 = vmatpush2.bf16.msra.mxu0 0
        %986 = vmatprep.subr.bf16.mxu0 0
        %987 = vmatpush2.bf16.msra.mxu0 0
        %988 = vmatprep.subr.bf16.mxu0 0
        %989 = vmatpush2.bf16.msra.mxu0 0
        %990 = vmatprep.mubr.bf16.mxu0 0
        %991 = vmatmul.mubr.bf16.gmra.mxu0 %v946
        %v992 = vpop.f32.mrf.mxu0
        %v993 = vadd.f32 %v870, %v992
        %v994 = vpop.f32.mrf.mxu0
        %v995 = vadd.f32 %v870, %v994
        %v996 = vpop.f32.mrf.mxu0
        %v997 = vpop.f32.mrf.mxu0
        %998 = vdwg.mxu0
        %999 = vmatprep.subr.bf16.mxu0 0
        %1000 = vmatpush1.bf16.msra.mxu0 0
        %1001 = vmatprep.subr.bf16.mxu0 0
        %1002 = vmatpush1.bf16.msra.mxu0 0
        %1003 = vmatprep.subr.bf16.mxu0 0
        %1004 = vmatpush1.bf16.msra.mxu0 0
        %1005 = vmatprep.subr.bf16.mxu0 0
        %1006 = vmatpush1.bf16.msra.mxu0 %v956
        %1007 = vmatprep.subr.bf16.mxu0 0
        %1008 = vmatpush1.bf16.msra.mxu0 %v928
        %1009 = vmatprep.subr.bf16.mxu0 0
        %1010 = vmatpush1.bf16.msra.mxu0 %v925
        %1011 = vmatprep.subr.bf16.mxu0 0
        %1012 = vmatpush1.bf16.msra.mxu0 %v922
        %1013 = vmatprep.subr.bf16.mxu0 0
        %1014 = vmatpush1.bf16.msra.mxu0 %v919
        %1015 = vmatprep.subr.bf16.mxu0 0
        %1016 = vmatpush2.bf16.msra.mxu0 0
        %1017 = vmatprep.subr.bf16.mxu0 0
        %1018 = vmatpush2.bf16.msra.mxu0 0
        %1019 = vmatprep.subr.bf16.mxu0 0
        %1020 = vmatpush2.bf16.msra.mxu0 0
        %1021 = vmatprep.subr.bf16.mxu0 0
        %1022 = vmatpush2.bf16.msra.mxu0 0
        %1023 = vmatprep.subr.bf16.mxu0 0
        %1024 = vmatpush2.bf16.msra.mxu0 0
        %1025 = vmatprep.subr.bf16.mxu0 0
        %1026 = vmatpush2.bf16.msra.mxu0 0
        %1027 = vmatprep.subr.bf16.mxu0 0
        %1028 = vmatpush2.bf16.msra.mxu0 0
        %1029 = vmatprep.subr.bf16.mxu0 0
        %1030 = vmatpush2.bf16.msra.mxu0 0
        %1031 = vmatprep.mubr.bf16.mxu0 0
        %1032 = vmatmul.mubr.bf16.gmra.mxu0 %v946
        %v1033 = vpop.f32.mrf.mxu0
        %v1034 = vadd.f32 %v870, %v1033
        %v1035 = vpop.f32.mrf.mxu0
        %v1036 = vpop.f32.mrf.mxu0
        %v1037 = vpop.f32.mrf.mxu0
        %1038 = vdwg.mxu0
        %vm1039 = vcmp.ge.f32.partialorder %v993, 0.0
        %vm1040 = vcmp.ge.f32.partialorder %v995, 0.0
        %vm1041 = vcmp.ge.f32.partialorder %v1034, 0.0
        %v1042 = vmul.f32 %v993, 0.2
        %v1043 = vmul.f32 %v995, 0.2
        %v1044 = vmul.f32 %v1034, 0.2
        %v1045 = vsel %vm1039, %v993, %v1042
        %v1046 = vsel %vm1040, %v995, %v1043
        %v1047 = vsel %vm1041, %v1034, %v1044
        %v1048 = vpack.c.bf16 %v1045, %v1045
        %v1049 = vpack.c.bf16 %v1046, %v1046
        %v1050 = vpack.c.bf16 %v1047, %v1047
        %v1054 = vunpack.c.l.b16 %v1048
        %v1055 = vunpack.c.l.b16 %v1049
        %v1056 = vunpack.c.l.b16 %v1050
        %v1057 = vpack.c.b16 %v1055, %v1054
        %v1058 = vpack.c.b16 %v1056, %v1056
        %1061 = vst [vmem:[%s217] sm:$0xff] %v1057
        %1062 = vst.msk [vmem:[%s217 + $0x8] sm:$0xf] %vm717, %v1058
        %s1063 = sand.u32 %s137, 1
        %s1064 = scalar_lea.sflag [#allocation6], %s1063
        %s1065 = sand.u32 %s137, 1
        %s1066 = smul.addr %s1065, 12
        %s1067 = scalar_lea.vmem [#allocation5], %s1066
        // Predicated region
        $region41: #{tpu_custom_call.1} parent=39 // pred_check
          %p1068 = pneg %p147
        $region42: #{tpu_custom_call.1} parent=39 // pred_check_branch
          %1070 = sbr.rel (%p1068) target = $region44
        $region43: #{tpu_custom_call.1} parent=39 // pred_region
          %s1072 = ssub.s32 192, 192
          %1073 = vsyncadd %s1064, %s1072
          %s1074 = smul.addr %s19, 3
          %s1075 = smul.addr %s1074, 64
          %s1076 = scalar_lea.hbm %s5, %s1075
          %s1078 = sshll.u32 %s1067, 4
          %s1079 = int_to_ptr.vmem [resolvable:$true] %s1078
          %1081 = dma.vmem_to_hbm [thread:$0]  %s1079, 192, %s1076, %s1064
        $region44: #{tpu_custom_call.1} parent=39 // pred_fallthru
          _
      $region40: #{tpu_custom_call.1} parent=5 // pred_fallthru
        _
      %p1082 = scmp.le.s32.totalorder 2, %s14
      // Predicated region
      $region45: #{tpu_custom_call.1} parent=5 // pred_check
        %p1083 = pneg %p1082
      $region46: #{tpu_custom_call.1} parent=5 // pred_check_branch
        %1085 = sbr.rel (%p1083) target = $region48
      $region47: #{tpu_custom_call.1} parent=5 // pred_region
        %s1086 = ssub.s32 %s14, 2
        // Predicated region
        $region49: #{tpu_custom_call.1} parent=47 // pred_check
          %p1087 = pneg %p153
        $region50: #{tpu_custom_call.1} parent=47 // pred_check_branch
          %1089 = sbr.rel (%p1087) target = $region52
        $region51: #{tpu_custom_call.1} parent=47 // pred_region
          %s1090 = sand.u32 %s138, 1
          %s1091 = scalar_lea.sflag [#allocation6], %s1090
          %s1092 = sand.u32 %s138, 1
          %s1093 = smul.addr %s1092, 12
          %s1094 = scalar_lea.vmem [#allocation5], %s1093
          %1095 = dma.done %s1091, 192
        $region52: #{tpu_custom_call.1} parent=47 // pred_fallthru
          _
      $region48: #{tpu_custom_call.1} parent=5 // pred_fallthru
        _
    $region6: #{tpu_custom_call.1} parent=1 // loop_footer
      %s18 = sadd.s32 1, %s14
    $region7: #{tpu_custom_call.1} parent=1 // loop_footer_branch
      %13 = sbr.rel target = $region3
    $region8: #{tpu_custom_call.1} parent=1 // loop_exit
      _
    %1096 = vsyncpa [#allocation6], 1
    %s1097 = scalar_lea.sflag [#allocation6], 1
    %1098 = vsyncpa %s1097, 1

</llo_original>
